<compile_context>
chip_gen: v7x
topology: tpu7x:2x2x1
jax: 0.10.0
libtpu: 0.0.40
codegen_flags: <defaults>
</compile_context>

<pallas_src>
import jax
import jax.numpy as jnp
from jax.experimental import pallas as pl
from jax.experimental.pallas import tpu as pltpu

_LANES = 128
_FAST_PATH_MAX_B = 2048  # below this, a fused XLA reduce beats a custom-call dispatch


def _linear_kb_kernel(b_ref, wT_ref, xT_ref, o_ref):
    """o[0, :] = sum_k wT[k, 0] * xT[k, :] + b   (general Linear(K -> 1)).

    xT_ref: (K, bb) input block, batch on the 128-lane axis.
    wT_ref: (K, 1)  full weight column, broadcast over lanes (works for any W).
    b_ref:  (1,)    bias scalar in SMEM.
    o_ref:  (1, bb) lane-dense output block (unmasked vst stores).
    """
    # f32 accumulation regardless of input dtype (robust to bf16 activations).
    prod = xT_ref[...].astype(jnp.float32) * wT_ref[...].astype(jnp.float32)
    row = jnp.sum(prod, axis=0, keepdims=True) + b_ref[0]          # (1, bb) f32
    o_ref[...] = row.astype(o_ref.dtype)


def _round_up(n, m):
    return ((n + m - 1) // m) * m


def exploding_linear(x, weight, bias, *, block_b=8192, force_pallas=False,
                     x_is_transposed=False):
    """General y = x @ weight.T + bias for weight of shape (1, K).

    x:      (B, K) float array -- or (K, B) if x_is_transposed=True (lets the
            producer hand over the lane-friendly layout and skip the extra
            HBM transpose pass).
    weight: (1, K);  bias: (1,).   Returns (B, 1), dtype of x.
    """
    if x_is_transposed:
        K, B = x.shape
        xT = x
    else:
        B, K = x.shape
        xT = x.T  # cheap for K=10; fuses upstream under jit when possible
    assert weight.shape == (1, K) and bias.shape == (1,)

    # Small-batch fast path: kernel work is ~2*K flops/row; at tiny B the
    # pallas_call dispatch dominates and XLA can fuse this into neighbours.
    if B <= _FAST_PATH_MAX_B and not force_pallas:
        xf = (x.T if x_is_transposed else x).astype(jnp.float32)
        return (xf @ weight.astype(jnp.float32).T + bias).astype(x.dtype)

    # ---- batch (lane) axis blocking -------------------------------------
    bb = min(block_b, B)
    if bb != B:
        bb = _round_up(bb, _LANES)        # partial blocks must be 128-aligned
    # v7x has 2 TensorCores per chip: make the "parallel" axis have >= 2 steps
    # once B is big enough for the split to pay for itself.
    if B >= 2 * _LANES and pl.cdiv(B, bb) < 2:
        bb = min(bb, _round_up(pl.cdiv(B, 2), _LANES))

    wT = weight.T                          # (K, 1) column, any (trained) values

    out = pl.pallas_call(
        _linear_kb_kernel,
        out_shape=jax.ShapeDtypeStruct((1, B), x.dtype),   # lane-dense slab
        grid=(pl.cdiv(B, bb),),
        in_specs=[
            # Bias scalar lives in SMEM (no padded VMEM tile / vector DMA).
            pl.BlockSpec(memory_space=pltpu.MemorySpace.SMEM),
            # Weight column: same block every step -> stays resident in VMEM.
            pl.BlockSpec((K, 1), lambda i: (0, 0)),
            # x^T block: batch on lanes, 10-wide feature axis on sublanes.
            pl.BlockSpec((K, bb), lambda i: (0, i)),
        ],
        out_specs=pl.BlockSpec((1, bb), lambda i: (0, i)),
        compiler_params=pltpu.CompilerParams(
            dimension_semantics=("parallel",)),
    )(bias, wT, xT)

    # (1, B) -> (B, 1): pure relabel of the same row-major data.
    return out.reshape(B, 1)


def init_params():
    in_features, out_features = 10, 1
    # nn.init.constant_(self.linear.weight, 10.0)
    weight = jnp.full((out_features, in_features), 10.0, dtype=jnp.float32)
    # nn.Linear default bias init: U(-1/sqrt(fan_in), +1/sqrt(fan_in)),
    # reproduced deterministically from a fixed key (synthetic, not a checkpoint).
    bound = 1.0 / jnp.sqrt(jnp.float32(in_features))
    bias = jax.random.uniform(
        jax.random.PRNGKey(42), (out_features,), dtype=jnp.float32,
        minval=-bound, maxval=bound,
    )
    return weight, bias


if __name__ == "__main__":
    batch, in_features = 8, 10

    x = jax.random.normal(
        jax.random.PRNGKey(0), (batch, in_features), dtype=jnp.float32
    )
    weight, bias = init_params()
    y_ref = x @ weight.T + bias

    # 1) Run the Pallas kernel at the module's small demo batch
    #    (force_pallas bypasses the plain-JAX small-batch fast path).
    y = exploding_linear(x, weight, bias, force_pallas=True)
    y = jax.block_until_ready(y)
    assert y.shape == (batch, 1)
    assert jnp.allclose(y, y_ref, rtol=1e-5, atol=1e-5)

    # 2) Exercise the multi-block "parallel" grid path (4 grid steps).
    x_big = jax.random.normal(
        jax.random.PRNGKey(1), (512, in_features), dtype=jnp.float32)
    y_big = jax.block_until_ready(
        exploding_linear(x_big, weight, bias, block_b=128, force_pallas=True))
    assert y_big.shape == (512, 1)
    assert jnp.allclose(y_big, x_big @ weight.T + bias, rtol=1e-5, atol=1e-5)

    # 3) Small-batch fast path (plain JAX) matches too.
    y_fast = jax.block_until_ready(exploding_linear(x, weight, bias))
    assert jnp.allclose(y_fast, y_ref, rtol=1e-5, atol=1e-5)

    print("KERNEL_OK")
</pallas_src>

<mosaic_0001>
module attributes {stable_mosaic.version = 11 : i64} {
  func.func @_linear_kb_kernel(%arg0: i32, %arg1: memref<1xf32, #tpu.memory_space<smem>>, %arg2: memref<10x1xf32, #tpu.memory_space<vmem>>, %arg3: memref<10x8xf32, #tpu.memory_space<vmem>>, %arg4: memref<1x8xf32, #tpu.memory_space<vmem>>) attributes {dimension_semantics = [#tpu.dimension_semantics<parallel>], iteration_bounds = array<i64: 1>, scalar_prefetch = 0 : i64, scratch_operands = 0 : i64, tpu.core_type = #tpu.core_type<tc>, window_params = [{transform_indices = @transform_0, window_bounds = array<i64: 1>}, {pipeline_mode = #tpu.pipeline_mode<synchronous>, transform_indices = @transform_1, window_bounds = array<i64: 10, 1>}, {transform_indices = @transform_2, window_bounds = array<i64: 10, 8>}, {transform_indices = @transform_3, window_bounds = array<i64: 1, 8>}]} {
    %c0 = arith.constant 0 : index
    %c0_0 = arith.constant 0 : index
    %0 = vector.load %arg3[%c0, %c0_0] : memref<10x8xf32, #tpu.memory_space<vmem>>, vector<10x8xf32>
    %c0_1 = arith.constant 0 : index
    %c0_2 = arith.constant 0 : index
    %1 = vector.load %arg2[%c0_1, %c0_2] : memref<10x1xf32, #tpu.memory_space<vmem>>, vector<10x1xf32>
    %2 = vector.broadcast %1 : vector<10x1xf32> to vector<10x8xf32>
    %3 = arith.mulf %0, %2 : vector<10x8xf32>
    %cst = arith.constant dense<0.000000e+00> : vector<8xf32>
    %4 = vector.multi_reduction <add>, %3, %cst [0] : vector<10x8xf32> to vector<8xf32>
    %5 = vector.shape_cast %4 : vector<8xf32> to vector<1x8xf32>
    %c0_3 = arith.constant 0 : index
    %6 = memref.load %arg1[%c0_3] : memref<1xf32, #tpu.memory_space<smem>>
    %7 = vector.broadcast %6 : f32 to vector<1x8xf32>
    %8 = arith.addf %5, %7 : vector<1x8xf32>
    %c0_4 = arith.constant 0 : index
    %c0_5 = arith.constant 0 : index
    %9 = vector.load %arg4[%c0_4, %c0_5] : memref<1x8xf32, #tpu.memory_space<vmem>>, vector<1x8xf32>
    tpu.vector_store %arg4[%c0_4, %c0_5], %8 {strides = array<i32>} : memref<1x8xf32, #tpu.memory_space<vmem>>, vector<1x8xf32>,
    return
  }
  func.func @transform_0(%arg0: i32) -> i32 {
    %c0_i32 = arith.constant 0 : i32
    %c0_i32_0 = arith.constant 0 : i32
    return %c0_i32 : i32
  }
  func.func @transform_1(%arg0: i32) -> (i32, i32) {
    %c0_i32 = arith.constant 0 : i32
    %c0_i32_0 = arith.constant 0 : i32
    %c0_i32_1 = arith.constant 0 : i32
    return %c0_i32, %c0_i32_0 : i32, i32
  }
  func.func @transform_2(%arg0: i32) -> (i32, i32) {
    %c0_i32 = arith.constant 0 : i32
    %c0_i32_0 = arith.constant 0 : i32
    return %c0_i32, %arg0 : i32, i32
  }
  func.func @transform_3(%arg0: i32) -> (i32, i32) {
    %c0_i32 = arith.constant 0 : i32
    %c0_i32_0 = arith.constant 0 : i32
    return %c0_i32, %arg0 : i32, i32
  }
}

</mosaic_0001>

<llo_original>
// kernel: tpu_custom_call.1
$region0: #{tpu_custom_call.1}
  #allocation0 [shape = 'u32[]', space=smem, size = 0x4, offset = 0x4, fixed_abs, tag = 'smem constant byte address 0x4 - core index']
  #allocation1 [shape = 'u32[144,128]{1,0:T(1,128)}', space=vmem, size = 0x12000, scoped, tag = 'internal scratch']
  #allocation2 [shape = 'f32[1]{0:T(128)S(6)}', space=smem, size = 0x200, scoped, tag = 'scoped memory for tpu_custom_call.1']
  %s0 = inlined_call_operand.<no memory space> [shape: f32[1], index: 0, kind: input, shape index: {}]
  %s1 = inlined_call_operand.vmem [shape: f32[10,1], index: 1, kind: input, shape index: {}]
  %s2 = inlined_call_operand.vmem [shape: f32[10,8], index: 2, kind: input, shape index: {}]
  %s3 = inlined_call_operand.hbm [shape: f32[1,8], index: 3, kind: output, shape index: {}]
  %s4 = sld [smem:[#allocation0]]
  $region22: #{tpu_custom_call.1} parent=0
    _
  %s6 = ssub.s32 1, %s4
  %s7 = scalar_select 0, %s6, %s4
  %8 = sst [smem:[#allocation2]] %s0
  $region1: #{tpu_custom_call.1} parent=0
    #allocation3 [shape = 'u8[512]{0}', space=vmem, size = 0x400, scoped, tag = 'output window, operand 0, single buffered']
    #allocation4 [shape = 's32[1]{0}', space=sflag, size = 0x4, scoped, tag = 'scoped memory for tpu_custom_call.1']
    %9 = vsyncpa [#allocation4], 0
    // Predicated region
    $region2: #{tpu_custom_call.1} parent=1 // pred_check
      _
    $region3: #{tpu_custom_call.1} parent=1 // pred_check_branch
      %11 = sbr.rel (0) target = $region5
    $region4: #{tpu_custom_call.1} parent=1 // pred_region
      _
    $region5: #{tpu_custom_call.1} parent=1 // pred_fallthru
      _
    // Predicated region
    $region6: #{tpu_custom_call.1} parent=1 // pred_check
      _
    $region7: #{tpu_custom_call.1} parent=1 // pred_check_branch
      %13 = sbr.rel (0) target = $region9
    $region8: #{tpu_custom_call.1} parent=1 // pred_region
      _
    $region9: #{tpu_custom_call.1} parent=1 // pred_fallthru
      _
    // Predicated region
    $region10: #{tpu_custom_call.1} parent=1 // pred_check
      _
    $region11: #{tpu_custom_call.1} parent=1 // pred_check_branch
      %15 = sbr.rel (0) target = $region13
    $region12: #{tpu_custom_call.1} parent=1 // pred_region
      _
    $region13: #{tpu_custom_call.1} parent=1 // pred_fallthru
      _
    %v16 = vld [vmem:[%s2] sm:$0xff]
    %v17 = vld [vmem:[%s2 + $0x8] sm:$0x3]
    %v18 = vld [vmem:[%s1] sm:$0xff]
    %v19 = vld [vmem:[%s1 + $0x8] sm:$0x3]
    %21 = vset.pattern.permute.xlu0 0
    %22 = vperm.xlu0 %21, %v18
    %v23 = vpop.permute.xlu0 %22
    %26 = vset.pattern.permute.xlu0 0
    %27 = vperm.xlu0 %26, %v19
    %v28 = vpop.permute.xlu0 %27
    %v30 = vmul.f32 %v16, %v23
    %v31 = vmul.f32 %v17, %v28
    %vm32 = vcmask 64512
    %v33 = vsel %vm32, %v30, 0.0
    %vm34 = vcmask 58368
    %v35 = vsel %vm34, %v31, 0.0
    %v36 = vadd.f32 %v33, %v35
    %v37 = vrot.slane %v36, 4
    %v38 = vadd.f32 %v36, %v37
    %v39 = vrot.slane %v38, 2
    %v40 = vadd.f32 %v38, %v39
    %v41 = vrot.slane %v40, 1
    %v42 = vadd.f32 %v40, %v41
    %s43 = sld [smem:[#allocation2]]
    %v44 = vstv %s43
    %v45 = vadd.f32 %v42, %v44
    %vm46 = vcmask 57344
    %47 = vst.msk [vmem:[#allocation3] sm:$0x1] %vm46, %v45
    // Predicated region
    $region14: #{tpu_custom_call.1} parent=1 // pred_check
      _
    $region15: #{tpu_custom_call.1} parent=1 // pred_check_branch
      %49 = sbr.rel (0) target = $region17
    $region16: #{tpu_custom_call.1} parent=1 // pred_region
      %s51 = ssub.s32 16, 16
      %52 = vsyncadd [#allocation4], %s51
      %s54 = sshll.u32 [#allocation3], 4
      %s55 = int_to_ptr.vmem [resolvable:$true] %s54
      %57 = dma.vmem_to_hbm [thread:$0]  %s55, 16, %s3, [#allocation4]
    $region17: #{tpu_custom_call.1} parent=1 // pred_fallthru
      _
    // Predicated region
    $region18: #{tpu_custom_call.1} parent=1 // pred_check
      _
    $region19: #{tpu_custom_call.1} parent=1 // pred_check_branch
      %59 = sbr.rel (0) target = $region21
    $region20: #{tpu_custom_call.1} parent=1 // pred_region
      %60 = dma.done [#allocation4], 16
    $region21: #{tpu_custom_call.1} parent=1 // pred_fallthru
      _
    %61 = vsyncpa [#allocation4], 1

</llo_original>
